<compile_context>
chip_gen: v7x
topology: tpu7x:2x2x1
jax: 0.10.0
libtpu: 0.0.40
codegen_flags: <defaults>
</compile_context>

<pallas_src>
import jax
import jax.numpy as jnp
from jax.experimental import pallas as pl
from jax.experimental.pallas import tpu as pltpu


def _affine_coupling_kernel(z1_ref, z2_ref, w1_ref, b1_ref,
                            ws_ref, bs_ref, wc_ref, bc_ref,
                            y2_ref, logdet_ref):
    # Hidden layer: h = relu(z1 @ W1 + b1)        -> (BM, lat)
    z1 = z1_ref[...].astype(jnp.float32)
    h = jnp.dot(z1, w1_ref[...], preferred_element_type=jnp.float32)
    h = jnp.maximum(h + b1_ref[...], 0.0)

    # Second layer, even/odd columns pre-split:   -> (BM, half) each
    shift = jnp.dot(h, ws_ref[...], preferred_element_type=jnp.float32) + bs_ref[...]
    scale = jnp.dot(h, wc_ref[...], preferred_element_type=jnp.float32) + bc_ref[...]

    # Affine coupling + per-sample log-determinant.
    z2 = z2_ref[...].astype(jnp.float32)
    y2_ref[...] = (z2 * jnp.exp(scale) + shift).astype(y2_ref.dtype)
    logdet_ref[...] = jnp.sum(scale, axis=1, keepdims=True).astype(logdet_ref.dtype)


def _round_up(x, m):
    return ((x + m - 1) // m) * m


def fold_coupling_params(params):
    """One-time parameter folding (do NOT call per forward)."""
    w1 = jnp.asarray(params["w1"], jnp.float32)      # (in, lat)
    b1 = jnp.asarray(params["b1"], jnp.float32)      # (lat,)
    w2 = jnp.asarray(params["w2"], jnp.float32)      # (lat, 2*half)
    b2 = jnp.asarray(params["b2"], jnp.float32)      # (2*half,)
    lat = w1.shape[1]
    return {
        "w1": w1,
        "b1": b1.reshape(1, lat),
        "ws": w2[:, 0::2],                           # even cols -> shift
        "bs": b2[0::2].reshape(1, -1),
        "wc": w2[:, 1::2],                           # odd cols  -> scale
        "bc": b2[1::2].reshape(1, -1),
    }


def _choose_batch_tile(B, block_b):
    n_tiles = max(1, pl.cdiv(B, block_b))
    if n_tiles == 1 and B >= 256:
        n_tiles = 2          # give v7x's second TensorCore a tile to work on
    bm = _round_up(pl.cdiv(B, n_tiles), 8)
    return min(bm, _round_up(B, 8))


def affine_coupling_forward(z1, z2, folded, *, block_b=4096):
    """Forward of AffineCouplingLayer. Returns ([y1, y2], log_det)."""
    B, in_size = z1.shape
    half = z2.shape[1]
    w1 = folded["w1"]
    lat = w1.shape[1]
    assert folded["ws"].shape == (lat, half) and folded["wc"].shape == (lat, half)

    BM = _choose_batch_tile(B, block_b)
    grid = (pl.cdiv(B, BM),)

    cost = pl.CostEstimate(
        flops=2 * B * (in_size * lat + 2 * lat * half),
        transcendentals=B * half,
        bytes_accessed=4 * (B * (in_size + 2 * half + 1)
                            + lat * (in_size + 2 * half + 1) + 2 * half),
    )

    y2, logdet = pl.pallas_call(
        _affine_coupling_kernel,
        out_shape=(
            jax.ShapeDtypeStruct((B, half), z2.dtype),
            jax.ShapeDtypeStruct((B, 1), jnp.float32),
        ),
        grid=grid,
        in_specs=[
            pl.BlockSpec((BM, in_size), lambda i: (i, 0)),   # z1 (batch-tiled)
            pl.BlockSpec((BM, half), lambda i: (i, 0)),      # z2 (batch-tiled)
            pl.BlockSpec((in_size, lat), lambda i: (0, 0)),  # W1   (VMEM-resident)
            pl.BlockSpec((1, lat), lambda i: (0, 0)),        # b1
            pl.BlockSpec((lat, half), lambda i: (0, 0)),     # Ws   (even cols)
            pl.BlockSpec((1, half), lambda i: (0, 0)),       # bs
            pl.BlockSpec((lat, half), lambda i: (0, 0)),     # Wc   (odd cols)
            pl.BlockSpec((1, half), lambda i: (0, 0)),       # bc
        ],
        out_specs=(
            pl.BlockSpec((BM, half), lambda i: (i, 0)),      # y2 (batch-major)
            pl.BlockSpec((BM, 1), lambda i: (i, 0)),         # log_det column
        ),
        compiler_params=pltpu.CompilerParams(
            dimension_semantics=("parallel",),
        ),
        cost_estimate=cost,
    )(z1, z2, w1, folded["b1"], folded["ws"], folded["bs"],
      folded["wc"], folded["bc"])

    y1 = z1                           # identity branch
    log_det = logdet.reshape(B)       # (B, 1) -> (B,)
    return [y1, y2], log_det


def reference_forward(z1, z2, params):
    w1, b1, w2, b2 = params["w1"], params["b1"], params["w2"], params["b2"]
    h = jnp.maximum(z1 @ w1 + b1, 0.0)
    features = h @ w2 + b2
    shift = features[:, 0::2]
    scale = features[:, 1::2]
    y2 = z2 * jnp.exp(scale) + shift
    log_det = jnp.sum(scale, axis=1)
    return [z1, y2], log_det


if __name__ == "__main__":
    # Shapes implied by the module: z1 -> MLP(inSize, outSize, latSize),
    # outSize = 2 * dim(z2) so the even/odd split matches z2.
    B, in_size, lat_size = 8, 16, 32
    half = 16
    out_size = 2 * half

    key = jax.random.PRNGKey(0)
    k1, k2, k3, k4, k5, k6 = jax.random.split(key, 6)

    params = {
        "w1": (jax.random.normal(k1, (in_size, lat_size), jnp.float32)
               / jnp.sqrt(in_size)),
        "b1": jax.random.normal(k2, (lat_size,), jnp.float32) * 0.01,
        "w2": (jax.random.normal(k3, (lat_size, out_size), jnp.float32)
               / jnp.sqrt(lat_size)),
        "b2": jax.random.normal(k4, (out_size,), jnp.float32) * 0.01,
    }

    z1 = jax.random.normal(k5, (B, in_size), jnp.float32)
    z2 = jax.random.normal(k6, (B, half), jnp.float32)

    folded = fold_coupling_params(params)          # one-time folding
    jax.block_until_ready(folded)

    (y1, y2), log_det = affine_coupling_forward(z1, z2, folded)
    jax.block_until_ready((y1, y2, log_det))

    (ry1, ry2), rld = reference_forward(z1, z2, params)
    assert jnp.allclose(y1, ry1, atol=1e-5, rtol=1e-5)
    assert jnp.allclose(y2, ry2, atol=1e-5, rtol=1e-5)
    assert jnp.allclose(log_det, rld, atol=1e-5, rtol=1e-5)

    print("KERNEL_OK")
</pallas_src>

<mosaic_0001>
module attributes {stable_mosaic.version = 11 : i64} {
  func.func @_affine_coupling_kernel(%arg0: i32, %arg1: memref<8x16xf32, #tpu.memory_space<vmem>>, %arg2: memref<8x16xf32, #tpu.memory_space<vmem>>, %arg3: memref<16x32xf32, #tpu.memory_space<vmem>>, %arg4: memref<1x32xf32, #tpu.memory_space<vmem>>, %arg5: memref<32x16xf32, #tpu.memory_space<vmem>>, %arg6: memref<1x16xf32, #tpu.memory_space<vmem>>, %arg7: memref<32x16xf32, #tpu.memory_space<vmem>>, %arg8: memref<1x16xf32, #tpu.memory_space<vmem>>, %arg9: memref<8x16xf32, #tpu.memory_space<vmem>>, %arg10: memref<8x1xf32, #tpu.memory_space<vmem>>) attributes {dimension_semantics = [#tpu.dimension_semantics<parallel>], iteration_bounds = array<i64: 1>, scalar_prefetch = 0 : i64, scratch_operands = 0 : i64, tpu.core_type = #tpu.core_type<tc>, window_params = [{transform_indices = @transform_0, window_bounds = array<i64: 8, 16>}, {transform_indices = @transform_1, window_bounds = array<i64: 8, 16>}, {pipeline_mode = #tpu.pipeline_mode<synchronous>, transform_indices = @transform_2, window_bounds = array<i64: 16, 32>}, {pipeline_mode = #tpu.pipeline_mode<synchronous>, transform_indices = @transform_3, window_bounds = array<i64: 1, 32>}, {pipeline_mode = #tpu.pipeline_mode<synchronous>, transform_indices = @transform_4, window_bounds = array<i64: 32, 16>}, {pipeline_mode = #tpu.pipeline_mode<synchronous>, transform_indices = @transform_5, window_bounds = array<i64: 1, 16>}, {pipeline_mode = #tpu.pipeline_mode<synchronous>, transform_indices = @transform_6, window_bounds = array<i64: 32, 16>}, {pipeline_mode = #tpu.pipeline_mode<synchronous>, transform_indices = @transform_7, window_bounds = array<i64: 1, 16>}, {transform_indices = @transform_8, window_bounds = array<i64: 8, 16>}, {transform_indices = @transform_9, window_bounds = array<i64: 8, 1>}]} {
    %c0 = arith.constant 0 : index
    %c0_0 = arith.constant 0 : index
    %0 = vector.load %arg1[%c0, %c0_0] : memref<8x16xf32, #tpu.memory_space<vmem>>, vector<8x16xf32>
    %c0_1 = arith.constant 0 : index
    %c0_2 = arith.constant 0 : index
    %1 = vector.load %arg3[%c0_1, %c0_2] : memref<16x32xf32, #tpu.memory_space<vmem>>, vector<16x32xf32>
    %cst = arith.constant dense<0.000000e+00> : vector<8x32xf32>
    %2 = tpu.matmul %0, %1, %cst {dimension_numbers = #tpu.dot_dimension_numbers<[1], [0], [0], [1], [0, 0, 1, 1], [], []>} : vector<8x16xf32>, vector<16x32xf32>, vector<8x32xf32> -> vector<8x32xf32>
    %c0_3 = arith.constant 0 : index
    %c0_4 = arith.constant 0 : index
    %3 = vector.load %arg4[%c0_3, %c0_4] : memref<1x32xf32, #tpu.memory_space<vmem>>, vector<1x32xf32>
    %4 = vector.broadcast %3 : vector<1x32xf32> to vector<8x32xf32>
    %5 = arith.addf %2, %4 : vector<8x32xf32>
    %cst_5 = arith.constant 0.000000e+00 : f32
    %6 = vector.broadcast %cst_5 : f32 to vector<8x32xf32>
    %7 = arith.maximumf %5, %6 : vector<8x32xf32>
    %c0_6 = arith.constant 0 : index
    %c0_7 = arith.constant 0 : index
    %8 = vector.load %arg5[%c0_6, %c0_7] : memref<32x16xf32, #tpu.memory_space<vmem>>, vector<32x16xf32>
    %cst_8 = arith.constant dense<0.000000e+00> : vector<8x16xf32>
    %9 = tpu.matmul %7, %8, %cst_8 {dimension_numbers = #tpu.dot_dimension_numbers<[1], [0], [0], [1], [0, 0, 1, 1], [], []>} : vector<8x32xf32>, vector<32x16xf32>, vector<8x16xf32> -> vector<8x16xf32>
    %c0_9 = arith.constant 0 : index
    %c0_10 = arith.constant 0 : index
    %10 = vector.load %arg6[%c0_9, %c0_10] : memref<1x16xf32, #tpu.memory_space<vmem>>, vector<1x16xf32>
    %11 = vector.broadcast %10 : vector<1x16xf32> to vector<8x16xf32>
    %12 = arith.addf %9, %11 : vector<8x16xf32>
    %c0_11 = arith.constant 0 : index
    %c0_12 = arith.constant 0 : index
    %13 = vector.load %arg7[%c0_11, %c0_12] : memref<32x16xf32, #tpu.memory_space<vmem>>, vector<32x16xf32>
    %cst_13 = arith.constant dense<0.000000e+00> : vector<8x16xf32>
    %14 = tpu.matmul %7, %13, %cst_13 {dimension_numbers = #tpu.dot_dimension_numbers<[1], [0], [0], [1], [0, 0, 1, 1], [], []>} : vector<8x32xf32>, vector<32x16xf32>, vector<8x16xf32> -> vector<8x16xf32>
    %c0_14 = arith.constant 0 : index
    %c0_15 = arith.constant 0 : index
    %15 = vector.load %arg8[%c0_14, %c0_15] : memref<1x16xf32, #tpu.memory_space<vmem>>, vector<1x16xf32>
    %16 = vector.broadcast %15 : vector<1x16xf32> to vector<8x16xf32>
    %17 = arith.addf %14, %16 : vector<8x16xf32>
    %c0_16 = arith.constant 0 : index
    %c0_17 = arith.constant 0 : index
    %18 = vector.load %arg2[%c0_16, %c0_17] : memref<8x16xf32, #tpu.memory_space<vmem>>, vector<8x16xf32>
    %19 = math.exp %17 : vector<8x16xf32>
    %20 = arith.mulf %18, %19 : vector<8x16xf32>
    %21 = arith.addf %20, %12 : vector<8x16xf32>
    %c0_18 = arith.constant 0 : index
    %c0_19 = arith.constant 0 : index
    %22 = vector.load %arg9[%c0_18, %c0_19] : memref<8x16xf32, #tpu.memory_space<vmem>>, vector<8x16xf32>
    tpu.vector_store %arg9[%c0_18, %c0_19], %21 {strides = array<i32>} : memref<8x16xf32, #tpu.memory_space<vmem>>, vector<8x16xf32>,
    %cst_20 = arith.constant dense<0.000000e+00> : vector<8xf32>
    %23 = vector.multi_reduction <add>, %17, %cst_20 [1] : vector<8x16xf32> to vector<8xf32>
    %24 = vector.shape_cast %23 : vector<8xf32> to vector<8x1xf32>
    %c0_21 = arith.constant 0 : index
    %c0_22 = arith.constant 0 : index
    %25 = vector.load %arg10[%c0_21, %c0_22] : memref<8x1xf32, #tpu.memory_space<vmem>>, vector<8x1xf32>
    tpu.vector_store %arg10[%c0_21, %c0_22], %24 {strides = array<i32>} : memref<8x1xf32, #tpu.memory_space<vmem>>, vector<8x1xf32>,
    return
  }
  func.func @transform_0(%arg0: i32) -> (i32, i32) {
    %c0_i32 = arith.constant 0 : i32
    %c0_i32_0 = arith.constant 0 : i32
    return %arg0, %c0_i32 : i32, i32
  }
  func.func @transform_1(%arg0: i32) -> (i32, i32) {
    %c0_i32 = arith.constant 0 : i32
    %c0_i32_0 = arith.constant 0 : i32
    return %arg0, %c0_i32 : i32, i32
  }
  func.func @transform_2(%arg0: i32) -> (i32, i32) {
    %c0_i32 = arith.constant 0 : i32
    %c0_i32_0 = arith.constant 0 : i32
    %c0_i32_1 = arith.constant 0 : i32
    return %c0_i32, %c0_i32_0 : i32, i32
  }
  func.func @transform_3(%arg0: i32) -> (i32, i32) {
    %c0_i32 = arith.constant 0 : i32
    %c0_i32_0 = arith.constant 0 : i32
    %c0_i32_1 = arith.constant 0 : i32
    return %c0_i32, %c0_i32_0 : i32, i32
  }
  func.func @transform_4(%arg0: i32) -> (i32, i32) {
    %c0_i32 = arith.constant 0 : i32
    %c0_i32_0 = arith.constant 0 : i32
    %c0_i32_1 = arith.constant 0 : i32
    return %c0_i32, %c0_i32_0 : i32, i32
  }
  func.func @transform_5(%arg0: i32) -> (i32, i32) {
    %c0_i32 = arith.constant 0 : i32
    %c0_i32_0 = arith.constant 0 : i32
    %c0_i32_1 = arith.constant 0 : i32
    return %c0_i32, %c0_i32_0 : i32, i32
  }
  func.func @transform_6(%arg0: i32) -> (i32, i32) {
    %c0_i32 = arith.constant 0 : i32
    %c0_i32_0 = arith.constant 0 : i32
    %c0_i32_1 = arith.constant 0 : i32
    return %c0_i32, %c0_i32_0 : i32, i32
  }
  func.func @transform_7(%arg0: i32) -> (i32, i32) {
    %c0_i32 = arith.constant 0 : i32
    %c0_i32_0 = arith.constant 0 : i32
    %c0_i32_1 = arith.constant 0 : i32
    return %c0_i32, %c0_i32_0 : i32, i32
  }
  func.func @transform_8(%arg0: i32) -> (i32, i32) {
    %c0_i32 = arith.constant 0 : i32
    %c0_i32_0 = arith.constant 0 : i32
    return %arg0, %c0_i32 : i32, i32
  }
  func.func @transform_9(%arg0: i32) -> (i32, i32) {
    %c0_i32 = arith.constant 0 : i32
    %c0_i32_0 = arith.constant 0 : i32
    return %arg0, %c0_i32 : i32, i32
  }
}

</mosaic_0001>

<llo_original>
// kernel: tpu_custom_call.1
$region0: #{tpu_custom_call.1}
  #allocation0 [shape = 'u32[]', space=smem, size = 0x4, offset = 0x4, fixed_abs, tag = 'smem constant byte address 0x4 - core index']
  #allocation1 [shape = 'u32[144,128]{1,0:T(1,128)}', space=vmem, size = 0x12000, scoped, tag = 'internal scratch']
  %s0 = inlined_call_operand.vmem [shape: f32[8,16], index: 0, kind: input, shape index: {}]
  %s1 = inlined_call_operand.vmem [shape: f32[8,16], index: 1, kind: input, shape index: {}]
  %s2 = inlined_call_operand.vmem [shape: f32[16,32], index: 2, kind: input, shape index: {}]
  %s3 = inlined_call_operand.vmem [shape: f32[1,32], index: 3, kind: input, shape index: {}]
  %s4 = inlined_call_operand.vmem [shape: f32[32,16], index: 4, kind: input, shape index: {}]
  %s5 = inlined_call_operand.vmem [shape: f32[1,16], index: 5, kind: input, shape index: {}]
  %s6 = inlined_call_operand.vmem [shape: f32[32,16], index: 6, kind: input, shape index: {}]
  %s7 = inlined_call_operand.vmem [shape: f32[1,16], index: 7, kind: input, shape index: {}]
  %s8 = inlined_call_operand.hbm [shape: f32[8,16], index: 8, kind: output, shape index: {0}]
  %s9 = inlined_call_operand.vmem [shape: f32[8,1], index: 9, kind: output, shape index: {1}]
  %10 = xla_tuple %s8, %s9
  %s11 = sld [smem:[#allocation0]]
  $region50: #{tpu_custom_call.1} parent=0
    _
  %s13 = ssub.s32 1, %s11
  %s14 = scalar_select 0, %s13, %s11
  $region1: #{tpu_custom_call.1} parent=0
    #allocation2 [shape = 'u8[4096]{0}', space=vmem, size = 0x1000, scoped, tag = 'output window, operand 0, single buffered']
    #allocation3 [shape = 's32[1]{0}', space=sflag, size = 0x4, scoped, tag = 'scoped memory for tpu_custom_call.1']
    %15 = vsyncpa [#allocation3], 0
    // Predicated region
    $region2: #{tpu_custom_call.1} parent=1 // pred_check
      _
    $region3: #{tpu_custom_call.1} parent=1 // pred_check_branch
      %17 = sbr.rel (0) target = $region5
    $region4: #{tpu_custom_call.1} parent=1 // pred_region
      _
    $region5: #{tpu_custom_call.1} parent=1 // pred_fallthru
      _
    // Predicated region
    $region6: #{tpu_custom_call.1} parent=1 // pred_check
      _
    $region7: #{tpu_custom_call.1} parent=1 // pred_check_branch
      %19 = sbr.rel (0) target = $region9
    $region8: #{tpu_custom_call.1} parent=1 // pred_region
      _
    $region9: #{tpu_custom_call.1} parent=1 // pred_fallthru
      _
    // Predicated region
    $region10: #{tpu_custom_call.1} parent=1 // pred_check
      _
    $region11: #{tpu_custom_call.1} parent=1 // pred_check_branch
      %21 = sbr.rel (0) target = $region13
    $region12: #{tpu_custom_call.1} parent=1 // pred_region
      _
    $region13: #{tpu_custom_call.1} parent=1 // pred_fallthru
      _
    // Predicated region
    $region14: #{tpu_custom_call.1} parent=1 // pred_check
      _
    $region15: #{tpu_custom_call.1} parent=1 // pred_check_branch
      %23 = sbr.rel (0) target = $region17
    $region16: #{tpu_custom_call.1} parent=1 // pred_region
      _
    $region17: #{tpu_custom_call.1} parent=1 // pred_fallthru
      _
    // Predicated region
    $region18: #{tpu_custom_call.1} parent=1 // pred_check
      _
    $region19: #{tpu_custom_call.1} parent=1 // pred_check_branch
      %25 = sbr.rel (0) target = $region21
    $region20: #{tpu_custom_call.1} parent=1 // pred_region
      _
    $region21: #{tpu_custom_call.1} parent=1 // pred_fallthru
      _
    // Predicated region
    $region22: #{tpu_custom_call.1} parent=1 // pred_check
      _
    $region23: #{tpu_custom_call.1} parent=1 // pred_check_branch
      %27 = sbr.rel (0) target = $region25
    $region24: #{tpu_custom_call.1} parent=1 // pred_region
      _
    $region25: #{tpu_custom_call.1} parent=1 // pred_fallthru
      _
    // Predicated region
    $region26: #{tpu_custom_call.1} parent=1 // pred_check
      _
    $region27: #{tpu_custom_call.1} parent=1 // pred_check_branch
      %29 = sbr.rel (0) target = $region29
    $region28: #{tpu_custom_call.1} parent=1 // pred_region
      _
    $region29: #{tpu_custom_call.1} parent=1 // pred_fallthru
      _
    // Predicated region
    $region30: #{tpu_custom_call.1} parent=1 // pred_check
      _
    $region31: #{tpu_custom_call.1} parent=1 // pred_check_branch
      %31 = sbr.rel (0) target = $region33
    $region32: #{tpu_custom_call.1} parent=1 // pred_region
      _
    $region33: #{tpu_custom_call.1} parent=1 // pred_fallthru
      _
    %v32 = vld [vmem:[%s0] sm:$0xff]
    %v33 = vld [vmem:[%s2] sm:$0xff]
    %v34 = vld [vmem:[%s2 + $0x8] sm:$0xff]
    %v35 = vld [vmem:[%s3] sm:$0x1]
    %v37 = vlaneseq
    %v38 = vshrl.u32 %v37, 7
    %v39 = vsub.s32 0, %v38
    %v40 = vrot.slane %v35, %v39
    %vm42 = vcmask 130048
    %v44 = vsel %vm42, %v32, 0
    %46 = vmatprep.subr.mxu0 0.0
    %47 = vmatpush1.msra.mxu0 %v33
    %48 = vmatprep.subr.mxu0 0.0
    %49 = vmatpush1.msra.mxu0 %v34
    %50 = vmatprep.subr.mxu0 0.0
    %51 = vmatpush1.msra.mxu0 0.0
    %52 = vmatprep.subr.mxu0 0.0
    %53 = vmatpush1.msra.mxu0 0.0
    %54 = vmatprep.subr.mxu0 0.0
    %55 = vmatpush1.msra.mxu0 0.0
    %56 = vmatprep.subr.mxu0 0.0
    %57 = vmatpush1.msra.mxu0 0.0
    %58 = vmatprep.subr.mxu0 0.0
    %59 = vmatpush1.msra.mxu0 0.0
    %60 = vmatprep.subr.mxu0 0.0
    %61 = vmatpush1.msra.mxu0 0.0
    %62 = vmatprep.subr.mxu0 0.0
    %63 = vmatpush1.msra.mxu0 0.0
    %64 = vmatprep.subr.mxu0 0.0
    %65 = vmatpush1.msra.mxu0 0.0
    %66 = vmatprep.subr.mxu0 0.0
    %67 = vmatpush1.msra.mxu0 0.0
    %68 = vmatprep.subr.mxu0 0.0
    %69 = vmatpush1.msra.mxu0 0.0
    %70 = vmatprep.subr.mxu0 0.0
    %71 = vmatpush1.msra.mxu0 0.0
    %72 = vmatprep.subr.mxu0 0.0
    %73 = vmatpush1.msra.mxu0 0.0
    %74 = vmatprep.subr.mxu0 0.0
    %75 = vmatpush1.msra.mxu0 0.0
    %76 = vmatprep.subr.mxu0 0.0
    %77 = vmatpush1.msra.mxu0 0.0
    %78 = vmatprep.subr.mxu0 0.0
    %79 = vmatpush1.msra.mxu0 0.0
    %80 = vmatprep.subr.mxu0 0.0
    %81 = vmatpush1.msra.mxu0 0.0
    %82 = vmatprep.subr.mxu0 0.0
    %83 = vmatpush1.msra.mxu0 0.0
    %84 = vmatprep.subr.mxu0 0.0
    %85 = vmatpush1.msra.mxu0 0.0
    %86 = vmatprep.subr.mxu0 0.0
    %87 = vmatpush1.msra.mxu0 0.0
    %88 = vmatprep.subr.mxu0 0.0
    %89 = vmatpush1.msra.mxu0 0.0
    %90 = vmatprep.subr.mxu0 0.0
    %91 = vmatpush1.msra.mxu0 0.0
    %92 = vmatprep.subr.mxu0 0.0
    %93 = vmatpush1.msra.mxu0 0.0
    %94 = vmatprep.subr.mxu0 0.0
    %95 = vmatpush1.msra.mxu0 0.0
    %96 = vmatprep.subr.mxu0 0.0
    %97 = vmatpush1.msra.mxu0 0.0
    %98 = vmatprep.subr.mxu0 0.0
    %99 = vmatpush1.msra.mxu0 0.0
    %100 = vmatprep.subr.mxu0 0.0
    %101 = vmatpush1.msra.mxu0 0.0
    %102 = vmatprep.subr.mxu0 0.0
    %103 = vmatpush1.msra.mxu0 0.0
    %104 = vmatprep.subr.mxu0 0.0
    %105 = vmatpush1.msra.mxu0 0.0
    %106 = vmatprep.subr.mxu0 0.0
    %107 = vmatpush1.msra.mxu0 0.0
    %108 = vmatprep.subr.mxu0 0.0
    %109 = vmatpush1.msra.mxu0 0.0
    %110 = vmatprep.mubr.f32.mxu0 0.0
    %111 = vmatmul.mubr.f32.gmra.mrb[0].mxu0 %v44
    %v112 = vpop.f32.mrb[0].mxu0
    %v113 = vadd.f32 %v40, %v112
    %v114 = vpop.f32.mrb[0].mxu0
    %115 = vdwg.mxu0
    %v116 = vmax.f32 %v113, 0.0
    %v117 = vld [vmem:[%s4] sm:$0xff]
    %v118 = vld [vmem:[%s4 + $0x8] sm:$0xff]
    %v119 = vld [vmem:[%s4 + $0x10] sm:$0xff]
    %v120 = vld [vmem:[%s4 + $0x18] sm:$0xff]
    %v121 = vld [vmem:[%s5] sm:$0x1]
    %v123 = vlaneseq
    %v124 = vshrl.u32 %v123, 7
    %v125 = vsub.s32 0, %v124
    %v126 = vrot.slane %v121, %v125
    %vm128 = vcmask 261120
    %v130 = vsel %vm128, %v116, 0
    %132 = vmatprep.subr.mxu0 0.0
    %133 = vmatpush1.msra.mxu0 %v117
    %134 = vmatprep.subr.mxu0 0.0
    %135 = vmatpush1.msra.mxu0 %v118
    %136 = vmatprep.subr.mxu0 0.0
    %137 = vmatpush1.msra.mxu0 %v119
    %138 = vmatprep.subr.mxu0 0.0
    %139 = vmatpush1.msra.mxu0 %v120
    %140 = vmatprep.subr.mxu0 0.0
    %141 = vmatpush1.msra.mxu0 0.0
    %142 = vmatprep.subr.mxu0 0.0
    %143 = vmatpush1.msra.mxu0 0.0
    %144 = vmatprep.subr.mxu0 0.0
    %145 = vmatpush1.msra.mxu0 0.0
    %146 = vmatprep.subr.mxu0 0.0
    %147 = vmatpush1.msra.mxu0 0.0
    %148 = vmatprep.subr.mxu0 0.0
    %149 = vmatpush1.msra.mxu0 0.0
    %150 = vmatprep.subr.mxu0 0.0
    %151 = vmatpush1.msra.mxu0 0.0
    %152 = vmatprep.subr.mxu0 0.0
    %153 = vmatpush1.msra.mxu0 0.0
    %154 = vmatprep.subr.mxu0 0.0
    %155 = vmatpush1.msra.mxu0 0.0
    %156 = vmatprep.subr.mxu0 0.0
    %157 = vmatpush1.msra.mxu0 0.0
    %158 = vmatprep.subr.mxu0 0.0
    %159 = vmatpush1.msra.mxu0 0.0
    %160 = vmatprep.subr.mxu0 0.0
    %161 = vmatpush1.msra.mxu0 0.0
    %162 = vmatprep.subr.mxu0 0.0
    %163 = vmatpush1.msra.mxu0 0.0
    %164 = vmatprep.subr.mxu0 0.0
    %165 = vmatpush1.msra.mxu0 0.0
    %166 = vmatprep.subr.mxu0 0.0
    %167 = vmatpush1.msra.mxu0 0.0
    %168 = vmatprep.subr.mxu0 0.0
    %169 = vmatpush1.msra.mxu0 0.0
    %170 = vmatprep.subr.mxu0 0.0
    %171 = vmatpush1.msra.mxu0 0.0
    %172 = vmatprep.subr.mxu0 0.0
    %173 = vmatpush1.msra.mxu0 0.0
    %174 = vmatprep.subr.mxu0 0.0
    %175 = vmatpush1.msra.mxu0 0.0
    %176 = vmatprep.subr.mxu0 0.0
    %177 = vmatpush1.msra.mxu0 0.0
    %178 = vmatprep.subr.mxu0 0.0
    %179 = vmatpush1.msra.mxu0 0.0
    %180 = vmatprep.subr.mxu0 0.0
    %181 = vmatpush1.msra.mxu0 0.0
    %182 = vmatprep.subr.mxu0 0.0
    %183 = vmatpush1.msra.mxu0 0.0
    %184 = vmatprep.subr.mxu0 0.0
    %185 = vmatpush1.msra.mxu0 0.0
    %186 = vmatprep.subr.mxu0 0.0
    %187 = vmatpush1.msra.mxu0 0.0
    %188 = vmatprep.subr.mxu0 0.0
    %189 = vmatpush1.msra.mxu0 0.0
    %190 = vmatprep.subr.mxu0 0.0
    %191 = vmatpush1.msra.mxu0 0.0
    %192 = vmatprep.subr.mxu0 0.0
    %193 = vmatpush1.msra.mxu0 0.0
    %194 = vmatprep.subr.mxu0 0.0
    %195 = vmatpush1.msra.mxu0 0.0
    %196 = vmatprep.mubr.f32.mxu0 0.0
    %197 = vmatmul.mubr.f32.gmra.mrb[0].mxu0 %v130
    %v198 = vpop.f32.mrb[0].mxu0
    %v199 = vadd.f32 %v126, %v198
    %v200 = vpop.f32.mrb[0].mxu0
    %201 = vdwg.mxu0
    %v202 = vld [vmem:[%s6] sm:$0xff]
    %v203 = vld [vmem:[%s6 + $0x8] sm:$0xff]
    %v204 = vld [vmem:[%s6 + $0x10] sm:$0xff]
    %v205 = vld [vmem:[%s6 + $0x18] sm:$0xff]
    %v206 = vld [vmem:[%s7] sm:$0x1]
    %v208 = vlaneseq
    %v209 = vshrl.u32 %v208, 7
    %v210 = vsub.s32 0, %v209
    %v211 = vrot.slane %v206, %v210
    %213 = vmatprep.subr.mxu0 0.0
    %214 = vmatpush1.msra.mxu0 %v202
    %215 = vmatprep.subr.mxu0 0.0
    %216 = vmatpush1.msra.mxu0 %v203
    %217 = vmatprep.subr.mxu0 0.0
    %218 = vmatpush1.msra.mxu0 %v204
    %219 = vmatprep.subr.mxu0 0.0
    %220 = vmatpush1.msra.mxu0 %v205
    %221 = vmatprep.subr.mxu0 0.0
    %222 = vmatpush1.msra.mxu0 0.0
    %223 = vmatprep.subr.mxu0 0.0
    %224 = vmatpush1.msra.mxu0 0.0
    %225 = vmatprep.subr.mxu0 0.0
    %226 = vmatpush1.msra.mxu0 0.0
    %227 = vmatprep.subr.mxu0 0.0
    %228 = vmatpush1.msra.mxu0 0.0
    %229 = vmatprep.subr.mxu0 0.0
    %230 = vmatpush1.msra.mxu0 0.0
    %231 = vmatprep.subr.mxu0 0.0
    %232 = vmatpush1.msra.mxu0 0.0
    %233 = vmatprep.subr.mxu0 0.0
    %234 = vmatpush1.msra.mxu0 0.0
    %235 = vmatprep.subr.mxu0 0.0
    %236 = vmatpush1.msra.mxu0 0.0
    %237 = vmatprep.subr.mxu0 0.0
    %238 = vmatpush1.msra.mxu0 0.0
    %239 = vmatprep.subr.mxu0 0.0
    %240 = vmatpush1.msra.mxu0 0.0
    %241 = vmatprep.subr.mxu0 0.0
    %242 = vmatpush1.msra.mxu0 0.0
    %243 = vmatprep.subr.mxu0 0.0
    %244 = vmatpush1.msra.mxu0 0.0
    %245 = vmatprep.subr.mxu0 0.0
    %246 = vmatpush1.msra.mxu0 0.0
    %247 = vmatprep.subr.mxu0 0.0
    %248 = vmatpush1.msra.mxu0 0.0
    %249 = vmatprep.subr.mxu0 0.0
    %250 = vmatpush1.msra.mxu0 0.0
    %251 = vmatprep.subr.mxu0 0.0
    %252 = vmatpush1.msra.mxu0 0.0
    %253 = vmatprep.subr.mxu0 0.0
    %254 = vmatpush1.msra.mxu0 0.0
    %255 = vmatprep.subr.mxu0 0.0
    %256 = vmatpush1.msra.mxu0 0.0
    %257 = vmatprep.subr.mxu0 0.0
    %258 = vmatpush1.msra.mxu0 0.0
    %259 = vmatprep.subr.mxu0 0.0
    %260 = vmatpush1.msra.mxu0 0.0
    %261 = vmatprep.subr.mxu0 0.0
    %262 = vmatpush1.msra.mxu0 0.0
    %263 = vmatprep.subr.mxu0 0.0
    %264 = vmatpush1.msra.mxu0 0.0
    %265 = vmatprep.subr.mxu0 0.0
    %266 = vmatpush1.msra.mxu0 0.0
    %267 = vmatprep.subr.mxu0 0.0
    %268 = vmatpush1.msra.mxu0 0.0
    %269 = vmatprep.subr.mxu0 0.0
    %270 = vmatpush1.msra.mxu0 0.0
    %271 = vmatprep.subr.mxu0 0.0
    %272 = vmatpush1.msra.mxu0 0.0
    %273 = vmatprep.subr.mxu0 0.0
    %274 = vmatpush1.msra.mxu0 0.0
    %275 = vmatprep.subr.mxu0 0.0
    %276 = vmatpush1.msra.mxu0 0.0
    %277 = vmatprep.mubr.f32.mxu0 0.0
    %278 = vmatmul.mubr.f32.gmra.mrb[0].mxu0 %v130
    %v279 = vpop.f32.mrb[0].mxu0
    %v280 = vadd.f32 %v211, %v279
    %v281 = vpop.f32.mrb[0].mxu0
    %282 = vdwg.mxu0
    %v283 = vld [vmem:[%s1] sm:$0xff]
    %v284 = vmul.f32 %v280, 1.442695
    %v285 = vpow.pop %v284
    %v286 = vmul.f32 %v283, %v285
    %v287 = vadd.f32 %v286, %v199
    %288 = vst.msk [vmem:[#allocation2] sm:$0xff] %vm42, %v287
    %v289 = vsel %vm42, %v280, 0.0
    %290 = vadd.xlane.f32.xlu0 %v289
    %v291 = vpop.xlane.xlu0 %290
    %vm292 = vcmask 7168
    %293 = vst.msk [vmem:[%s9] sm:$0xff] %vm292, %v291
    // Predicated region
    $region34: #{tpu_custom_call.1} parent=1 // pred_check
      _
    $region35: #{tpu_custom_call.1} parent=1 // pred_check_branch
      %295 = sbr.rel (0) target = $region37
    $region36: #{tpu_custom_call.1} parent=1 // pred_region
      %s297 = ssub.s32 128, 128
      %298 = vsyncadd [#allocation3], %s297
      %s300 = sshll.u32 [#allocation2], 4
      %s301 = int_to_ptr.vmem [resolvable:$true] %s300
      %303 = dma.vmem_to_hbm [thread:$0]  %s301, 128, %s8, [#allocation3]
    $region37: #{tpu_custom_call.1} parent=1 // pred_fallthru
      _
    // Predicated region
    $region38: #{tpu_custom_call.1} parent=1 // pred_check
      _
    $region39: #{tpu_custom_call.1} parent=1 // pred_check_branch
      %305 = sbr.rel (0) target = $region41
    $region40: #{tpu_custom_call.1} parent=1 // pred_region
      _
    $region41: #{tpu_custom_call.1} parent=1 // pred_fallthru
      _
    // Predicated region
    $region42: #{tpu_custom_call.1} parent=1 // pred_check
      _
    $region43: #{tpu_custom_call.1} parent=1 // pred_check_branch
      %307 = sbr.rel (0) target = $region45
    $region44: #{tpu_custom_call.1} parent=1 // pred_region
      %308 = dma.done [#allocation3], 128
    $region45: #{tpu_custom_call.1} parent=1 // pred_fallthru
      _
    // Predicated region
    $region46: #{tpu_custom_call.1} parent=1 // pred_check
      _
    $region47: #{tpu_custom_call.1} parent=1 // pred_check_branch
      %310 = sbr.rel (0) target = $region49
    $region48: #{tpu_custom_call.1} parent=1 // pred_region
      _
    $region49: #{tpu_custom_call.1} parent=1 // pred_fallthru
      _
    %311 = vsyncpa [#allocation3], 1

</llo_original>
